<compile_context>
chip_gen: v7x
topology: tpu7x:2x2x1
jax: 0.10.0
libtpu: 0.0.40
codegen_flags: <defaults>
</compile_context>

<pallas_src>
import functools

import jax
import jax.numpy as jnp
from jax.experimental import pallas as pl
from jax.experimental.pallas import tpu as pltpu


# ---------------------------------------------------------------------------
# Kernel
# ---------------------------------------------------------------------------
def _layernorm_kernel(x_ref, a_ref, b_ref, o_ref, *, eps):
    x = x_ref[...].astype(jnp.float32)                  # (block_rows, H)
    h = x.shape[-1]
    mean = jnp.mean(x, axis=-1, keepdims=True)
    xc = x - mean                                       # centered (two-pass form)
    var_unbiased = jnp.sum(xc * xc, axis=-1, keepdims=True) * (1.0 / (h - 1))
    # Exact per-row normalizer: only `block_rows` scalars, so exact divide is
    # free here and matches the torch float32 reference closely.
    inv = 1.0 / (jnp.sqrt(var_unbiased) + eps)          # (block_rows, 1)
    a = a_ref[...].astype(jnp.float32)                  # (1, H)
    b = b_ref[...].astype(jnp.float32)                  # (1, H)
    o_ref[...] = (a * (xc * inv) + b).astype(o_ref.dtype)


# ---------------------------------------------------------------------------
# Tiling heuristics (generation-agnostic, v7x-safe).
# ---------------------------------------------------------------------------
_TILE_F32_BYTES_TARGET = 2 * 1024 * 1024     # ~2 MiB f32 working set per block
_MAX_BLOCK_ROWS = 8192                       # byte-based cap dominates; this is a sanity bound
_MIN_GRID_STEPS = 4                          # >= 2 steps per TensorCore on v7x


def _round_down_to(v, m):
    return (v // m) * m


def _sublane_multiple(dtype):
    itemsize = jnp.dtype(dtype).itemsize
    if itemsize >= 4:
        return 8
    if itemsize == 2:
        return 16
    return 32


def _pick_block_rows(rows, h, dtype):
    sub = _sublane_multiple(dtype)
    if rows <= sub:
        return rows                           # single (full) block
    # Byte-based target: fill ~2 MiB of f32 working set per tile.
    br = _TILE_F32_BYTES_TARGET // (h * 4)
    br = max(sub, _round_down_to(br, sub))
    br = min(br, _MAX_BLOCK_ROWS)
    br = min(br, rows)
    br = max(sub, _round_down_to(br, sub))
    # Keep >= _MIN_GRID_STEPS grid steps (>= 2 per TC on v7x) when rows allow,
    # so both cores keep prefetch/writeback overlapped.
    if pl.cdiv(rows, br) < _MIN_GRID_STEPS and rows >= _MIN_GRID_STEPS * sub:
        br = max(sub, _round_down_to(pl.cdiv(rows, _MIN_GRID_STEPS), sub))
    return br


# ---------------------------------------------------------------------------
# Wrapper
# ---------------------------------------------------------------------------
def pallas_layernorm(x, a_2, b_2, eps=1e-6, block_rows=None):
    orig_shape = x.shape
    h = orig_shape[-1]
    if h < 2:
        raise ValueError("unbiased std (ddof=1) requires features >= 2")
    x2 = x.reshape(-1, h)
    rows = x2.shape[0]
    if block_rows is None:
        block_rows = _pick_block_rows(rows, h, x2.dtype)
    grid = pl.cdiv(rows, block_rows)          # partial edge block allowed

    a2 = a_2.reshape(1, h)
    b2 = b_2.reshape(1, h)

    itemsize = jnp.dtype(x2.dtype).itemsize
    in_blk = block_rows * h * itemsize
    out_blk = block_rows * h * itemsize
    f32_blk = block_rows * h * 4
    param_bytes = (a2.size + b2.size) * jnp.dtype(a2.dtype).itemsize
    # Double-buffered in/out blocks + a few block-sized f32 temporaries the
    # body materializes + params + margin.  Clamp to [16 MiB, 64 MiB] (v7x cap).
    vmem_limit = 2 * (in_blk + out_blk) + 3 * f32_blk + 4 * param_bytes + (4 << 20)
    vmem_limit = int(min(max(vmem_limit, 16 << 20), 64 << 20))

    cost = pl.CostEstimate(
        flops=8 * rows * h,
        transcendentals=2 * rows,
        bytes_accessed=2 * rows * h * itemsize + param_bytes,
    )

    out = pl.pallas_call(
        functools.partial(_layernorm_kernel, eps=eps),
        out_shape=jax.ShapeDtypeStruct((rows, h), x.dtype),
        grid=(grid,),
        in_specs=[
            pl.BlockSpec((block_rows, h), lambda i: (i, 0)),
            pl.BlockSpec((1, h), lambda i: (0, 0)),   # scale: constant block
            pl.BlockSpec((1, h), lambda i: (0, 0)),   # shift: constant block
        ],
        out_specs=pl.BlockSpec((block_rows, h), lambda i: (i, 0)),
        compiler_params=pltpu.CompilerParams(
            dimension_semantics=("parallel",),
            vmem_limit_bytes=vmem_limit,
        ),
        cost_estimate=cost,
    )(x2, a2, b2)
    return out.reshape(orig_shape)


# ---------------------------------------------------------------------------
# Module wrapper mirroring the PyTorch LayerNorm.
# ---------------------------------------------------------------------------
class LayerNorm:
    def __init__(self, features, eps=1e-6, dtype=jnp.float32):
        self.a_2 = jnp.ones((features,), dtype)
        self.b_2 = jnp.zeros((features,), dtype)
        self.eps = eps

    def __call__(self, x):
        return pallas_layernorm(x, self.a_2, self.b_2, self.eps)


# ---------------------------------------------------------------------------
# Pure-JAX reference (torch.std default is unbiased, eps added to std).
# ---------------------------------------------------------------------------
def _ref_layernorm(x, a_2, b_2, eps):
    x = x.astype(jnp.float32)
    mean = jnp.mean(x, axis=-1, keepdims=True)
    std = jnp.std(x, axis=-1, keepdims=True, ddof=1)
    return a_2.astype(jnp.float32) * (x - mean) / (std + eps) + b_2.astype(jnp.float32)


if __name__ == "__main__":
    key = jax.random.PRNGKey(0)
    k1, k2, k3, k4, k5 = jax.random.split(key, 5)

    # Case 1: module-shaped toy input (batch=2, seq=8, hidden=32), default
    # params (ones / zeros) exactly as nn.Parameter init.
    B, S, H = 2, 8, 32
    x = jax.random.normal(k1, (B, S, H), dtype=jnp.float32)
    ln = LayerNorm(H)
    out = jax.block_until_ready(ln(x))
    ref = _ref_layernorm(x, ln.a_2, ln.b_2, ln.eps)
    assert jnp.allclose(out, ref, atol=1e-3, rtol=1e-3), "mismatch (case 1)"

    # Case 2: lane-dense hidden (multiple of 128), non-trivial scale/shift,
    # multi-step grid (rows=64 -> 4 grid steps of 16 rows).
    B2, S2, H2 = 4, 16, 256
    x2 = jax.random.normal(k2, (B2, S2, H2), dtype=jnp.float32)
    a2 = jax.random.normal(k3, (H2,), dtype=jnp.float32)
    b2 = jax.random.normal(k4, (H2,), dtype=jnp.float32)
    out2 = jax.block_until_ready(pallas_layernorm(x2, a2, b2))
    ref2 = _ref_layernorm(x2, a2, b2, 1e-6)
    assert jnp.allclose(out2, ref2, atol=1e-3, rtol=1e-3), "mismatch (case 2)"

    # Case 3: bf16 input with rows not divisible by the (16-row-aligned) block
    # -> exercises dtype-aware sublane rounding + the partial edge block path.
    B3, S3, H3 = 2, 20, 128
    x3 = jax.random.normal(k5, (B3, S3, H3), dtype=jnp.float32).astype(jnp.bfloat16)
    a3 = jnp.ones((H3,), jnp.bfloat16)
    b3 = jnp.zeros((H3,), jnp.bfloat16)
    out3 = jax.block_until_ready(pallas_layernorm(x3, a3, b3))
    ref3 = _ref_layernorm(x3.astype(jnp.float32), a3, b3, 1e-6)
    assert jnp.allclose(out3.astype(jnp.float32), ref3, atol=5e-2, rtol=5e-2), \
        "mismatch (case 3)"

    # TODO(synk): training-mode dropout / residual wiring belongs to the outer
    # SublayerConnection, not this LayerNorm module, so it is intentionally
    # not part of this kernel.

    print("KERNEL_OK")
</pallas_src>

<mosaic_0001>
module attributes {stable_mosaic.version = 11 : i64} {
  func.func @_layernorm_kernel(%arg0: i32, %arg1: memref<16x32xf32, #tpu.memory_space<vmem>>, %arg2: memref<1x32xf32, #tpu.memory_space<vmem>>, %arg3: memref<1x32xf32, #tpu.memory_space<vmem>>, %arg4: memref<16x32xf32, #tpu.memory_space<vmem>>) attributes {dimension_semantics = [#tpu.dimension_semantics<parallel>], iteration_bounds = array<i64: 1>, scalar_prefetch = 0 : i64, scratch_operands = 0 : i64, tpu.core_type = #tpu.core_type<tc>, window_params = [{transform_indices = @transform_0, window_bounds = array<i64: 16, 32>}, {pipeline_mode = #tpu.pipeline_mode<synchronous>, transform_indices = @transform_1, window_bounds = array<i64: 1, 32>}, {pipeline_mode = #tpu.pipeline_mode<synchronous>, transform_indices = @transform_2, window_bounds = array<i64: 1, 32>}, {transform_indices = @transform_3, window_bounds = array<i64: 16, 32>}]} {
    %c0 = arith.constant 0 : index
    %c0_0 = arith.constant 0 : index
    %0 = vector.load %arg1[%c0, %c0_0] : memref<16x32xf32, #tpu.memory_space<vmem>>, vector<16x32xf32>
    %cst = arith.constant dense<0.000000e+00> : vector<16xf32>
    %1 = vector.multi_reduction <add>, %0, %cst [1] : vector<16x32xf32> to vector<16xf32>
    %2 = vector.shape_cast %1 : vector<16xf32> to vector<16x1xf32>
    %cst_1 = arith.constant 3.200000e+01 : f32
    %3 = vector.broadcast %cst_1 : f32 to vector<16x1xf32>
    %4 = arith.divf %2, %3 : vector<16x1xf32>
    %5 = vector.broadcast %4 : vector<16x1xf32> to vector<16x32xf32>
    %6 = arith.subf %0, %5 : vector<16x32xf32>
    %7 = arith.mulf %6, %6 : vector<16x32xf32>
    %cst_2 = arith.constant dense<0.000000e+00> : vector<16xf32>
    %8 = vector.multi_reduction <add>, %7, %cst_2 [1] : vector<16x32xf32> to vector<16xf32>
    %9 = vector.shape_cast %8 : vector<16xf32> to vector<16x1xf32>
    %cst_3 = arith.constant 0.0322580636 : f32
    %10 = vector.broadcast %cst_3 : f32 to vector<16x1xf32>
    %11 = arith.mulf %9, %10 : vector<16x1xf32>
    %12 = math.sqrt %11 : vector<16x1xf32>
    %cst_4 = arith.constant 9.99999997E-7 : f32
    %13 = vector.broadcast %cst_4 : f32 to vector<16x1xf32>
    %14 = arith.addf %12, %13 : vector<16x1xf32>
    %cst_5 = arith.constant 1.000000e+00 : f32
    %15 = vector.broadcast %cst_5 : f32 to vector<16x1xf32>
    %16 = arith.divf %15, %14 : vector<16x1xf32>
    %c0_6 = arith.constant 0 : index
    %c0_7 = arith.constant 0 : index
    %17 = vector.load %arg2[%c0_6, %c0_7] : memref<1x32xf32, #tpu.memory_space<vmem>>, vector<1x32xf32>
    %c0_8 = arith.constant 0 : index
    %c0_9 = arith.constant 0 : index
    %18 = vector.load %arg3[%c0_8, %c0_9] : memref<1x32xf32, #tpu.memory_space<vmem>>, vector<1x32xf32>
    %19 = vector.broadcast %16 : vector<16x1xf32> to vector<16x32xf32>
    %20 = arith.mulf %6, %19 : vector<16x32xf32>
    %21 = vector.broadcast %17 : vector<1x32xf32> to vector<16x32xf32>
    %22 = arith.mulf %21, %20 : vector<16x32xf32>
    %23 = vector.broadcast %18 : vector<1x32xf32> to vector<16x32xf32>
    %24 = arith.addf %22, %23 : vector<16x32xf32>
    %c0_10 = arith.constant 0 : index
    %c0_11 = arith.constant 0 : index
    %25 = vector.load %arg4[%c0_10, %c0_11] : memref<16x32xf32, #tpu.memory_space<vmem>>, vector<16x32xf32>
    tpu.vector_store %arg4[%c0_10, %c0_11], %24 {strides = array<i32>} : memref<16x32xf32, #tpu.memory_space<vmem>>, vector<16x32xf32>,
    return
  }
  func.func @transform_0(%arg0: i32) -> (i32, i32) {
    %c0_i32 = arith.constant 0 : i32
    %c0_i32_0 = arith.constant 0 : i32
    return %arg0, %c0_i32 : i32, i32
  }
  func.func @transform_1(%arg0: i32) -> (i32, i32) {
    %c0_i32 = arith.constant 0 : i32
    %c0_i32_0 = arith.constant 0 : i32
    %c0_i32_1 = arith.constant 0 : i32
    return %c0_i32, %c0_i32_0 : i32, i32
  }
  func.func @transform_2(%arg0: i32) -> (i32, i32) {
    %c0_i32 = arith.constant 0 : i32
    %c0_i32_0 = arith.constant 0 : i32
    %c0_i32_1 = arith.constant 0 : i32
    return %c0_i32, %c0_i32_0 : i32, i32
  }
  func.func @transform_3(%arg0: i32) -> (i32, i32) {
    %c0_i32 = arith.constant 0 : i32
    %c0_i32_0 = arith.constant 0 : i32
    return %arg0, %c0_i32 : i32, i32
  }
}

</mosaic_0001>

<llo_original>
// kernel: tpu_custom_call.1
$region0: #{tpu_custom_call.1}
  #allocation0 [shape = 'u32[]', space=smem, size = 0x4, offset = 0x4, fixed_abs, tag = 'smem constant byte address 0x4 - core index']
  #allocation1 [shape = 'u32[144,128]{1,0:T(1,128)}', space=vmem, size = 0x12000, scoped, tag = 'internal scratch']
  %s0 = inlined_call_operand.hbm [shape: f32[16,32], index: 0, kind: input, shape index: {}]
  %s1 = inlined_call_operand.vmem [shape: f32[1,32], index: 1, kind: input, shape index: {}]
  %s2 = inlined_call_operand.vmem [shape: f32[1,32], index: 2, kind: input, shape index: {}]
  %s3 = inlined_call_operand.hbm [shape: f32[16,32], index: 3, kind: output, shape index: {}]
  %s4 = sld [smem:[#allocation0]]
  $region26: #{tpu_custom_call.1} parent=0
    _
  %s6 = ssub.s32 1, %s4
  %s7 = scalar_select 0, %s6, %s4
  $region1: #{tpu_custom_call.1} parent=0
    #allocation2 [shape = 'u8[8192]{0}', space=vmem, size = 0x2000, scoped, tag = 'input window, operand 0, single buffered']
    #allocation3 [shape = 's32[1]{0}', space=sflag, size = 0x4, scoped, tag = 'scoped memory for tpu_custom_call.1']
    #allocation4 [shape = 's32[1]{0}', space=sflag, size = 0x4, scoped, tag = 'scoped memory for tpu_custom_call.1']
    #allocation5 [shape = 'u8[8192]{0}', space=vmem, size = 0x2000, scoped, tag = 'output window, operand 0, single buffered']
    %8 = vsyncpa [#allocation3], 0
    %9 = vsyncpa [#allocation4], 0
    // Predicated region
    $region2: #{tpu_custom_call.1} parent=1 // pred_check
      _
    $region3: #{tpu_custom_call.1} parent=1 // pred_check_branch
      %11 = sbr.rel (0) target = $region5
    $region4: #{tpu_custom_call.1} parent=1 // pred_region
      %s13 = ssub.s32 256, 256
      %14 = vsyncadd [#allocation3], %s13
      %s15 = sshll.u32 [#allocation2], 4
      %s16 = int_to_ptr.vmem [resolvable:$true] %s15
      %21 = dma.hbm_to_vmem [thread:$0]  %s0, 256, %s16, [#allocation3], 128, 128, 8
    $region5: #{tpu_custom_call.1} parent=1 // pred_fallthru
      _
    // Predicated region
    $region6: #{tpu_custom_call.1} parent=1 // pred_check
      _
    $region7: #{tpu_custom_call.1} parent=1 // pred_check_branch
      %23 = sbr.rel (0) target = $region9
    $region8: #{tpu_custom_call.1} parent=1 // pred_region
      _
    $region9: #{tpu_custom_call.1} parent=1 // pred_fallthru
      _
    // Predicated region
    $region10: #{tpu_custom_call.1} parent=1 // pred_check
      _
    $region11: #{tpu_custom_call.1} parent=1 // pred_check_branch
      %25 = sbr.rel (0) target = $region13
    $region12: #{tpu_custom_call.1} parent=1 // pred_region
      _
    $region13: #{tpu_custom_call.1} parent=1 // pred_fallthru
      _
    // Predicated region
    $region14: #{tpu_custom_call.1} parent=1 // pred_check
      _
    $region15: #{tpu_custom_call.1} parent=1 // pred_check_branch
      %27 = sbr.rel (0) target = $region17
    $region16: #{tpu_custom_call.1} parent=1 // pred_region
      %28 = dma.done [#allocation3], 256
    $region17: #{tpu_custom_call.1} parent=1 // pred_fallthru
      _
    %v29 = vld [vmem:[#allocation2] sm:$0xff]
    %v30 = vld [vmem:[#allocation2 + $0x8] sm:$0xff]
    %vm31 = vcmask 261120
    %v32 = vsel %vm31, %v29, 0.0
    %33 = vadd.xlane.f32.xlu0 %v32
    %v34 = vpop.xlane.xlu0 %33
    %v35 = vsel %vm31, %v30, 0.0
    %36 = vadd.xlane.f32.xlu0 %v35
    %v37 = vpop.xlane.xlu0 %36
    %v38 = vrcp.pop 32.0
    %v39 = vmul.f32 %v34, %v38
    %v40 = vmul.f32 %v37, %v38
    %v41 = vsub.f32 %v29, %v39
    %v42 = vsub.f32 %v30, %v40
    %v43 = vmul.f32 %v41, %v41
    %v44 = vmul.f32 %v42, %v42
    %v45 = vsel %vm31, %v43, 0.0
    %46 = vadd.xlane.f32.xlu0 %v45
    %v47 = vpop.xlane.xlu0 %46
    %v48 = vsel %vm31, %v44, 0.0
    %49 = vadd.xlane.f32.xlu0 %v48
    %v50 = vpop.xlane.xlu0 %49
    %v51 = vmul.f32 %v47, 0.032258064
    %v52 = vmul.f32 %v50, 0.032258064
    %v53 = vrsqrt.pop %v51
    %v54 = vmul.f32 %v51, %v53
    %vm55 = vcmp.eq.f32.partialorder %v51, inf
    %v56 = vsel %vm55, %v51, %v54
    %vm57 = vcmp.eq.f32.partialorder %v51, 0.0
    %v58 = vand.u32 %v51, 2147483648
    %v59 = vsel %vm57, %v58, %v56
    %v60 = vrsqrt.pop %v52
    %v61 = vmul.f32 %v52, %v60
    %vm62 = vcmp.eq.f32.partialorder %v52, inf
    %v63 = vsel %vm62, %v52, %v61
    %vm64 = vcmp.eq.f32.partialorder %v52, 0.0
    %v65 = vand.u32 %v52, 2147483648
    %v66 = vsel %vm64, %v65, %v63
    %v67 = vadd.f32 %v59, 1e-06
    %v68 = vadd.f32 %v66, 1e-06
    %v69 = vrcp.pop %v67
    %v70 = vmul.f32 1.0, %v69
    %v71 = vrcp.pop %v68
    %v72 = vmul.f32 1.0, %v71
    %v73 = vld [vmem:[%s1] sm:$0x1]
    %v74 = vld [vmem:[%s2] sm:$0x1]
    %v75 = vmul.f32 %v41, %v70
    %v76 = vmul.f32 %v42, %v72
    %v78 = vlaneseq
    %v79 = vshrl.u32 %v78, 7
    %v80 = vsub.s32 0, %v79
    %v81 = vrot.slane %v73, %v80
    %v83 = vmul.f32 %v81, %v75
    %v84 = vmul.f32 %v81, %v76
    %v86 = vlaneseq
    %v87 = vshrl.u32 %v86, 7
    %v88 = vsub.s32 0, %v87
    %v89 = vrot.slane %v74, %v88
    %v91 = vadd.f32 %v83, %v89
    %v92 = vadd.f32 %v84, %v89
    %93 = vst.msk [vmem:[#allocation5] sm:$0xff] %vm31, %v91
    %94 = vst.msk [vmem:[#allocation5 + $0x8] sm:$0xff] %vm31, %v92
    // Predicated region
    $region18: #{tpu_custom_call.1} parent=1 // pred_check
      _
    $region19: #{tpu_custom_call.1} parent=1 // pred_check_branch
      %96 = sbr.rel (0) target = $region21
    $region20: #{tpu_custom_call.1} parent=1 // pred_region
      %s98 = ssub.s32 256, 256
      %99 = vsyncadd [#allocation4], %s98
      %s100 = sshll.u32 [#allocation5], 4
      %s101 = int_to_ptr.vmem [resolvable:$true] %s100
      %106 = dma.vmem_to_hbm [thread:$0]  %s101, 256, %s3, [#allocation4], 128, 128, 8
    $region21: #{tpu_custom_call.1} parent=1 // pred_fallthru
      _
    // Predicated region
    $region22: #{tpu_custom_call.1} parent=1 // pred_check
      _
    $region23: #{tpu_custom_call.1} parent=1 // pred_check_branch
      %108 = sbr.rel (0) target = $region25
    $region24: #{tpu_custom_call.1} parent=1 // pred_region
      %109 = dma.done [#allocation4], 256
    $region25: #{tpu_custom_call.1} parent=1 // pred_fallthru
      _
    %110 = vsyncpa [#allocation3], 1
    %111 = vsyncpa [#allocation4], 1

</llo_original>
